<compile_context>
chip_gen: v5e
topology: v5e:2x2
jax: 0.10.0
libtpu: 0.0.40
codegen_flags: <defaults>
</compile_context>

<pallas_src>
import jax
import jax.numpy as jnp
from jax.experimental import pallas as pl
from jax.experimental.pallas import tpu as pltpu

_K, _S, _P = 3, 2, 1          # Conv1d(kernel_size=3, stride=2, padding=1)
_LANE = 128                   # TPU lane width
_SUBLANE = 8                  # TPU sublane width (f32)


def _conv1d_mm_kernel(w_ref, b_ref, xc_ref, o_ref):
    """One (batch, lane-tile) grid step: (C,3C) @ (3C,T) matmul + bias."""
    # w_ref : (C_pad, 3*C_pad)   constant across the grid (fetched once)
    # b_ref : (C_pad, 1) f32     constant across the grid
    # xc_ref: (1, 3*C_pad, T_L)  im2col columns for this batch / lane tile
    # o_ref : (1, C_pad, T_L)
    acc = jnp.dot(w_ref[...], xc_ref[0],
                  preferred_element_type=jnp.float32)   # MXU, f32 accumulate
    acc = acc + b_ref[...]                              # bias broadcast (VPU, f32)
    o_ref[0] = acc.astype(o_ref.dtype)


def _round_up(v, m):
    return ((v + m - 1) // m) * m


def _pick_lane_tile(l_out, c_pad, itemsize):
    """Lane tile: multiple of 128, sized so double-buffered activation + output
    blocks stay within ~16 MiB (fits v5e/v6e/v7x scoped-VMEM comfortably)."""
    if l_out <= _LANE:
        return l_out                              # full-extent block (allowed)
    budget = 16 * 1024 * 1024
    per_lane = 2 * (_K + 1) * c_pad * itemsize    # (im2col + out) * double-buffer
    t = max(_LANE, (budget // per_lane) // _LANE * _LANE)
    t = min(t, 512)                               # keep v7x (64 MiB VMEM) safe
    t = min(t, _round_up(l_out, _LANE))           # don't overshoot short L_out
    return t


def downsample1d(x, weight, bias, *, compute_dtype=None):
    """Conv1d(dim, dim, 3, stride=2, padding=1) on NCL input.

    x: (N, C, L); weight: (C, C, 3); bias: (C,) -> (N, C, L_out).
    compute_dtype: optional narrower matmul dtype (e.g. jnp.bfloat16 on
    v6e/v7x); accumulation always stays f32.
    """
    N, C, L = x.shape
    L_out = (L + 2 * _P - _K) // _S + 1
    C_pad = _round_up(C, _SUBLANE)
    cd = compute_dtype if compute_dtype is not None else x.dtype

    # --- im2col + weight packing (pure data movement; allow_input_fusion lets
    # XLA fuse this producer into the kernel's input DMA). ---
    x_pad = jnp.pad(x, ((0, 0), (0, 0), (_P, _P)))                        # (N, C, L+2)
    # cols[n, k, ci, t] = x_pad[n, ci, 2*t + k]
    cols = jnp.stack([x_pad[:, :, k::_S][:, :, :L_out] for k in range(_K)],
                     axis=1)                                              # (N, K, C, L_out)
    if C_pad != C:
        cols = jnp.pad(cols, ((0, 0), (0, 0), (0, C_pad - C), (0, 0)))
    x_cols = cols.reshape(N, _K * C_pad, L_out).astype(cd)                # (N, 3*C_pad, L_out)

    # w2[co, k*C_pad + ci] = weight[co, ci, k]
    w_t = jnp.transpose(weight, (0, 2, 1))                                # (C, K, C)
    if C_pad != C:
        w_t = jnp.pad(w_t, ((0, C_pad - C), (0, 0), (0, C_pad - C)))
    w2 = w_t.reshape(C_pad, _K * C_pad).astype(cd)                        # (C_pad, 3*C_pad)
    b2 = jnp.pad(bias, (0, C_pad - C)).reshape(C_pad, 1).astype(jnp.float32)

    T_L = _pick_lane_tile(L_out, C_pad, jnp.dtype(cd).itemsize)
    grid = (N, pl.cdiv(L_out, T_L))

    out = pl.pallas_call(
        _conv1d_mm_kernel,
        out_shape=jax.ShapeDtypeStruct((N, C_pad, L_out), x.dtype),
        grid_spec=pltpu.PrefetchScalarGridSpec(
            num_scalar_prefetch=0,
            grid=grid,
            in_specs=[
                # Weight & bias: constant index_map -> DMA'd once, reused.
                pl.BlockSpec((C_pad, _K * C_pad), lambda n, j: (0, 0)),
                pl.BlockSpec((C_pad, 1), lambda n, j: (0, 0)),
                # im2col activations: one batch row, one 128-aligned lane tile.
                pl.BlockSpec((1, _K * C_pad, T_L), lambda n, j: (n, 0, j)),
            ],
            out_specs=pl.BlockSpec((1, C_pad, T_L), lambda n, j: (n, 0, j)),
        ),
        compiler_params=pltpu.CompilerParams(
            # Independent tiles -> both axes parallel (megacore / 2 TCs on v7x).
            dimension_semantics=("parallel", "parallel"),
            # Allow XLA to fuse the pad/gather/reshape producer of x_cols into
            # the input DMA instead of materializing it in HBM.
            allow_input_fusion=[False, False, True],
            # Headroom for larger tiles on v5e/v6e; still within v7x's VMEM.
            vmem_limit_bytes=64 * 1024 * 1024,
        ),
    )(w2, b2, x_cols)

    if C_pad != C:
        out = out[:, :C, :]
    return out


if __name__ == "__main__":
    key = jax.random.PRNGKey(0)
    k_x, k_w, k_b = jax.random.split(key, 3)

    N, C, L = 2, 4, 16          # batch=2, dim=4, length=16 -> L_out=8
    x = jax.random.normal(k_x, (N, C, L), dtype=jnp.float32)

    # Deterministic parameter init (Conv1d(dim, dim, 3) -> weight (C, C, 3), bias (C,))
    fan_in = C * _K
    bound = 1.0 / (fan_in ** 0.5)
    weight = jax.random.uniform(k_w, (C, C, _K), minval=-bound, maxval=bound,
                                dtype=jnp.float32)
    bias = jax.random.uniform(k_b, (C,), minval=-bound, maxval=bound,
                              dtype=jnp.float32)

    out = jax.block_until_ready(downsample1d(x, weight, bias))

    # Reference check against XLA's conv (same semantics as torch Conv1d).
    ref = jax.lax.conv_general_dilated(
        x, weight, window_strides=(_S,), padding=((_P, _P),),
        dimension_numbers=("NCH", "OIH", "NCH")) + bias[None, :, None]
    assert out.shape == (N, C, (L + 2 * _P - _K) // _S + 1)
    assert jnp.allclose(out, ref, atol=1e-5, rtol=1e-5)

    print("KERNEL_OK")
</pallas_src>

<mosaic_0001>
module attributes {stable_mosaic.version = 11 : i64} {
  func.func @_conv1d_mm_kernel(%arg0: i32, %arg1: i32, %arg2: memref<8x24xf32, #tpu.memory_space<vmem>>, %arg3: memref<8x1xf32, #tpu.memory_space<vmem>>, %arg4: memref<1x24x8xf32, #tpu.memory_space<vmem>>, %arg5: memref<1x8x8xf32, #tpu.memory_space<vmem>>) attributes {dimension_semantics = [#tpu.dimension_semantics<parallel>, #tpu.dimension_semantics<parallel>], iteration_bounds = array<i64: 2, 1>, scalar_prefetch = 0 : i64, scratch_operands = 0 : i64, tpu.core_type = #tpu.core_type<tc>, window_params = [{pipeline_mode = #tpu.pipeline_mode<synchronous>, transform_indices = @transform_0, window_bounds = array<i64: 8, 24>}, {pipeline_mode = #tpu.pipeline_mode<synchronous>, transform_indices = @transform_1, window_bounds = array<i64: 8, 1>}, {transform_indices = @transform_2, window_bounds = array<i64: 1, 24, 8>}, {transform_indices = @transform_3, window_bounds = array<i64: 1, 8, 8>}]} {
    %c0 = arith.constant 0 : index
    %c0_0 = arith.constant 0 : index
    %0 = vector.load %arg2[%c0, %c0_0] : memref<8x24xf32, #tpu.memory_space<vmem>>, vector<8x24xf32>
    %c0_1 = arith.constant 0 : index
    %c0_2 = arith.constant 0 : index
    %c0_3 = arith.constant 0 : index
    %1 = vector.load %arg4[%c0_1, %c0_2, %c0_3] : memref<1x24x8xf32, #tpu.memory_space<vmem>>, vector<1x24x8xf32>
    %2 = vector.shape_cast %1 : vector<1x24x8xf32> to vector<24x8xf32>
    %cst = arith.constant dense<0.000000e+00> : vector<8x8xf32>
    %3 = tpu.matmul %0, %2, %cst {dimension_numbers = #tpu.dot_dimension_numbers<[1], [0], [0], [1], [0, 0, 1, 1], [], []>} : vector<8x24xf32>, vector<24x8xf32>, vector<8x8xf32> -> vector<8x8xf32>
    %c0_4 = arith.constant 0 : index
    %c0_5 = arith.constant 0 : index
    %4 = vector.load %arg3[%c0_4, %c0_5] : memref<8x1xf32, #tpu.memory_space<vmem>>, vector<8x1xf32>
    %5 = vector.broadcast %4 : vector<8x1xf32> to vector<8x8xf32>
    %6 = arith.addf %3, %5 : vector<8x8xf32>
    %c0_6 = arith.constant 0 : index
    %c0_7 = arith.constant 0 : index
    %c0_8 = arith.constant 0 : index
    %7 = vector.load %arg5[%c0_6, %c0_7, %c0_8] : memref<1x8x8xf32, #tpu.memory_space<vmem>>, vector<1x8x8xf32>
    %8 = vector.shape_cast %7 : vector<1x8x8xf32> to vector<8x8xf32>
    %9 = vector.shape_cast %6 : vector<8x8xf32> to vector<1x8x8xf32>
    tpu.vector_store %arg5[%c0_6, %c0_7, %c0_8], %9 {strides = array<i32>} : memref<1x8x8xf32, #tpu.memory_space<vmem>>, vector<1x8x8xf32>,
    return
  }
  func.func @transform_0(%arg0: i32, %arg1: i32) -> (i32, i32) {
    %c0_i32 = arith.constant 0 : i32
    %c0_i32_0 = arith.constant 0 : i32
    %c0_i32_1 = arith.constant 0 : i32
    return %c0_i32, %c0_i32_0 : i32, i32
  }
  func.func @transform_1(%arg0: i32, %arg1: i32) -> (i32, i32) {
    %c0_i32 = arith.constant 0 : i32
    %c0_i32_0 = arith.constant 0 : i32
    %c0_i32_1 = arith.constant 0 : i32
    return %c0_i32, %c0_i32_0 : i32, i32
  }
  func.func @transform_2(%arg0: i32, %arg1: i32) -> (i32, i32, i32) {
    %c0_i32 = arith.constant 0 : i32
    %c0_i32_0 = arith.constant 0 : i32
    return %arg0, %c0_i32, %arg1 : i32, i32, i32
  }
  func.func @transform_3(%arg0: i32, %arg1: i32) -> (i32, i32, i32) {
    %c0_i32 = arith.constant 0 : i32
    %c0_i32_0 = arith.constant 0 : i32
    return %arg0, %c0_i32, %arg1 : i32, i32, i32
  }
}

</mosaic_0001>

<llo_original>
// kernel: tpu_custom_call.1
$region0: #{tpu_custom_call.1}
  #allocation0 [shape = 'u32[]', space=smem, size = 0x4, offset = 0x4, fixed_abs, tag = 'smem constant byte address 0x4 - core index']
  #allocation1 [shape = 'u32[72,128]{1,0:T(1,128)}', space=vmem, size = 0x9000, scoped, tag = 'internal scratch']
  %s0 = inlined_call_operand.vmem [shape: f32[8,24], index: 0, kind: input, shape index: {}]
  %s1 = inlined_call_operand.vmem [shape: f32[8,1], index: 1, kind: input, shape index: {}]
  %s2 = inlined_call_operand.vmem [shape: f32[2,24,8], index: 2, kind: input, shape index: {}]
  %s3 = inlined_call_operand.hbm [shape: f32[2,8,8], index: 3, kind: output, shape index: {}]
  %s4 = sld [smem:[#allocation0]]
  $region45: #{tpu_custom_call.1} parent=0
    _
  %s6 = ssub.s32 1, %s4
  %s7 = scalar_select 0, %s6, %s4
  $region1: #{tpu_custom_call.1} parent=0
    #allocation2 [shape = 'u8[8192]{0}', space=vmem, size = 0x2000, scoped, tag = 'output window, operand 0']
    #allocation3 [shape = 's32[2]{0}', space=sflag, size = 0x8, scoped, tag = 'scoped memory for tpu_custom_call.1']
    %8 = vsyncpa [#allocation3], 0
    %s9 = scalar_lea.sflag [#allocation3], 1
    %10 = vsyncpa %s9, 0
    loop: start=0, step=1, limit=4
    $region2: #{tpu_custom_call.1} parent=1 // loop_pre_header
      _
    $region3: #{tpu_custom_call.1} parent=1 // loop_header
      %s12 = sphi 0, %s16
      %p13 = scmp.ge.s32.totalorder %s12, 4
      %s19 = sphi 0, %s31
      %s20 = sphi 0, %s27
      %s21 = sphi 0, %s19
      %s22 = sphi 0, %s20
      %s23 = sphi 0, %s21
      %s24 = sphi 0, %s22
      %s32 = sphi 0, %s32
      %s34 = sphi 0, %s32
      %s35 = sphi 0, %s34
      %s49 = sphi 0, %s35
      %s53 = sphi 0, %s53
      %s55 = sphi 0, %s53
      %s56 = sphi 0, %s55
      %s70 = sphi 0, %s56
      %s78 = sphi 0, %s80
      %s81 = sphi 0, %s78
      %s82 = sphi 0, %s81
      %s98 = sphi 0, %s82
      %s106 = sphi 0, %s108
      %s109 = sphi 0, %s106
      %s110 = sphi 0, %s109
      %s126 = sphi 0, %s110
    $region4: #{tpu_custom_call.1} parent=1 // loop_header_branch
      %15 = sbr.rel (%p13) target = $region8
    $region5: #{tpu_custom_call.1} parent=1 // loop_body
      %s17 = ssub.s32 %s12, 1
      %s18 = ssub.s32 %s12, 2
      %s25 = sadd.s32 1, %s20
      %p26 = scmp.ge.s32.totalorder %s25, 1
      %s27 = scalar_select %p26, 0, %s25
      %s28 = sadd.s32 1, %s19
      %s29 = scalar_select %p26, %s28, %s19
      %p30 = scmp.ge.s32.totalorder %s29, 2
      %s31 = scalar_select %p30, 0, %s29
      %s33 = sadd.s32 %s32, 1
      %p36 = scmp.eq.s32.totalorder %s12, 1
      %p37 = scmp.ne.s32.totalorder %s32, %s34
      %p38 = scmp.eq.s32.totalorder %s12, 0
      %p39 = por %p37, %p38
      %p40 = scmp.ne.s32.totalorder %s32, %s34
      %p41 = scmp.eq.s32.totalorder %s17, 1
      %p42 = por %p40, %p41
      %p43 = scmp.ne.s32.totalorder %s34, %s35
      %p44 = scmp.eq.s32.totalorder %s17, 0
      %p45 = por %p43, %p44
      %p46 = scmp.ne.s32.totalorder %s34, %s35
      %p47 = scmp.eq.s32.totalorder %s18, 1
      %p48 = por %p46, %p47
      %p50 = scmp.ne.s32.totalorder %s35, %s49
      %p51 = scmp.eq.s32.totalorder %s18, 0
      %p52 = por %p50, %p51
      %s54 = sadd.s32 %s53, 1
      %p57 = scmp.eq.s32.totalorder %s12, 1
      %p58 = scmp.ne.s32.totalorder %s53, %s55
      %p59 = scmp.eq.s32.totalorder %s12, 0
      %p60 = por %p58, %p59
      %p61 = scmp.ne.s32.totalorder %s53, %s55
      %p62 = scmp.eq.s32.totalorder %s17, 1
      %p63 = por %p61, %p62
      %p64 = scmp.ne.s32.totalorder %s55, %s56
      %p65 = scmp.eq.s32.totalorder %s17, 0
      %p66 = por %p64, %p65
      %p67 = scmp.ne.s32.totalorder %s55, %s56
      %p68 = scmp.eq.s32.totalorder %s18, 1
      %p69 = por %p67, %p68
      %p71 = scmp.ne.s32.totalorder %s56, %s70
      %p72 = scmp.eq.s32.totalorder %s18, 0
      %p73 = por %p71, %p72
      %s74 = ssub.s32 %s19, %s31
      %s75 = ssub.s32 %s20, %s27
      %s76 = sor.u32 %s74, %s75
      %p77 = scmp.eq.s32.totalorder %s76, 0
      %s79 = sadd.s32 %s78, 1
      %s80 = scalar_select %p77, %s78, %s79
      %p83 = pneg %p77
      %p84 = scmp.eq.s32.totalorder %s12, 1
      %p85 = por %p83, %p84
      %p86 = scmp.ne.s32.totalorder %s78, %s81
      %p87 = scmp.eq.s32.totalorder %s12, 0
      %p88 = por %p86, %p87
      %p89 = scmp.ne.s32.totalorder %s78, %s81
      %p90 = scmp.eq.s32.totalorder %s17, 1
      %p91 = por %p89, %p90
      %p92 = scmp.ne.s32.totalorder %s81, %s82
      %p93 = scmp.eq.s32.totalorder %s17, 0
      %p94 = por %p92, %p93
      %p95 = scmp.ne.s32.totalorder %s81, %s82
      %p96 = scmp.eq.s32.totalorder %s18, 1
      %p97 = por %p95, %p96
      %p99 = scmp.ne.s32.totalorder %s82, %s98
      %p100 = scmp.eq.s32.totalorder %s18, 0
      %p101 = por %p99, %p100
      %s102 = ssub.s32 %s19, %s31
      %s103 = ssub.s32 %s20, %s27
      %s104 = sor.u32 %s102, %s103
      %p105 = scmp.eq.s32.totalorder %s104, 0
      %s107 = sadd.s32 %s106, 1
      %s108 = scalar_select %p105, %s106, %s107
      %p111 = pneg %p105
      %p112 = scmp.eq.s32.totalorder %s12, 1
      %p113 = por %p111, %p112
      %p114 = scmp.ne.s32.totalorder %s106, %s109
      %p115 = scmp.eq.s32.totalorder %s12, 0
      %p116 = por %p114, %p115
      %p117 = scmp.ne.s32.totalorder %s106, %s109
      %p118 = scmp.eq.s32.totalorder %s17, 1
      %p119 = por %p117, %p118
      %p120 = scmp.ne.s32.totalorder %s109, %s110
      %p121 = scmp.eq.s32.totalorder %s17, 0
      %p122 = por %p120, %p121
      %p123 = scmp.ne.s32.totalorder %s109, %s110
      %p124 = scmp.eq.s32.totalorder %s18, 1
      %p125 = por %p123, %p124
      %p127 = scmp.ne.s32.totalorder %s110, %s126
      %p128 = scmp.eq.s32.totalorder %s18, 0
      %p129 = por %p127, %p128
      %p130 = scmp.le.s32.totalorder 1, %s12
      %p131 = scmp.lt.s32.totalorder %s12, 3
      %p132 = pnand %p130, %p131
      %p133 = pneg %p132
      // Predicated region
      $region9: #{tpu_custom_call.1} parent=5 // pred_check
        _
      $region10: #{tpu_custom_call.1} parent=5 // pred_check_branch
        %135 = sbr.rel (%p132) target = $region12
      $region11: #{tpu_custom_call.1} parent=5 // pred_region
        %s136 = ssub.s32 %s12, 1
        // Predicated region
        $region13: #{tpu_custom_call.1} parent=11 // pred_check
          %p137 = pneg %p45
        $region14: #{tpu_custom_call.1} parent=11 // pred_check_branch
          %139 = sbr.rel (%p137) target = $region16
        $region15: #{tpu_custom_call.1} parent=11 // pred_region
          _
        $region16: #{tpu_custom_call.1} parent=11 // pred_fallthru
          _
        // Predicated region
        $region17: #{tpu_custom_call.1} parent=11 // pred_check
          %p140 = pneg %p66
        $region18: #{tpu_custom_call.1} parent=11 // pred_check_branch
          %142 = sbr.rel (%p140) target = $region20
        $region19: #{tpu_custom_call.1} parent=11 // pred_region
          _
        $region20: #{tpu_custom_call.1} parent=11 // pred_fallthru
          _
      $region12: #{tpu_custom_call.1} parent=5 // pred_fallthru
        _
      %p143 = scmp.lt.s32.totalorder %s12, 2
      // Predicated region
      $region21: #{tpu_custom_call.1} parent=5 // pred_check
        %p144 = pneg %p143
      $region22: #{tpu_custom_call.1} parent=5 // pred_check_branch
        %146 = sbr.rel (%p144) target = $region24
      $region23: #{tpu_custom_call.1} parent=5 // pred_region
        // Predicated region
        $region25: #{tpu_custom_call.1} parent=23 // pred_check
          %p147 = pneg %p88
        $region26: #{tpu_custom_call.1} parent=23 // pred_check_branch
          %149 = sbr.rel (%p147) target = $region28
        $region27: #{tpu_custom_call.1} parent=23 // pred_region
          %p150 = scmp.lt.s32.totalorder %s19, 1
          %s151 = scalar_select %p150, %s19, 1
          %p152 = scmp.lt.s32.totalorder %s20, 0
          %s153 = scalar_select %p152, %s20, 0
          %s154 = smul.addr %s151, 3
          %s155 = sadd.s32 %s153, %s154
          %s156 = smul.addr %s155, 8
          %s157 = scalar_lea.vmem %s2, %s156
        $region28: #{tpu_custom_call.1} parent=23 // pred_fallthru
          _
      $region24: #{tpu_custom_call.1} parent=5 // pred_fallthru
        _
      %p158 = scmp.le.s32.totalorder 1, %s12
      %p159 = scmp.lt.s32.totalorder %s12, 3
      %p160 = pnand %p158, %p159
      %p161 = pneg %p160
      // Predicated region
      $region29: #{tpu_custom_call.1} parent=5 // pred_check
        _
      $region30: #{tpu_custom_call.1} parent=5 // pred_check_branch
        %163 = sbr.rel (%p160) target = $region32
      $region31: #{tpu_custom_call.1} parent=5 // pred_region
        %s164 = ssub.s32 %s12, 1
        %p165 = pneg %p45
        %p166 = pneg %p42
        %p167 = pneg %p66
        %p168 = pneg %p63
        %p169 = scmp.lt.s32.totalorder %s21, 1
        %s170 = scalar_select %p169, %s21, 1
        %p171 = scmp.lt.s32.totalorder %s22, 0
        %s172 = scalar_select %p171, %s22, 0
        %s173 = smul.addr %s170, 3
        %s174 = sadd.s32 %s172, %s173
        %s175 = smul.addr %s174, 8
        %s176 = scalar_lea.vmem %s2, %s175
        %p177 = pneg %p94
        %p178 = pneg %p91
        %p179 = pneg %p122
        %p180 = pneg %p119
        %s181 = sand.u32 %s109, 1
        %s182 = scalar_lea.sflag [#allocation3], %s181
        %s183 = sand.u32 %s109, 1
        %s184 = smul.addr %s183, 8
        %s185 = scalar_lea.vmem [#allocation2], %s184
        %p186 = scmp.lt.s32.totalorder %s21, 1
        %s187 = scalar_select %p186, %s21, 1
        %p188 = scmp.lt.s32.totalorder %s22, 0
        %s189 = scalar_select %p188, %s22, 0
        %s190 = smul.addr %s187, 3
        %s191 = sadd.s32 %s189, %s190
        %s192 = smul.addr %s191, 8
        %s193 = scalar_lea.vmem %s2, %s192
        %v194 = vld [vmem:[%s0] sm:$0xff]
        %v195 = vld [vmem:[%s193] sm:$0xff]
        %v196 = vld [vmem:[%s193 + $0x8] sm:$0xff]
        %v197 = vld [vmem:[%s193 + $0x10] sm:$0xff]
        %v198 = vld [vmem:[%s1] sm:$0xff]
        %200 = vset.pattern.permute.xlu0 0
        %201 = vperm.xlu0 %200, %v198
        %v202 = vpop.permute.xlu0 %201
        %vm204 = vcmask 195584
        %v206 = vsel %vm204, %v194, 0
        %208 = vmatpush.msra.mxu0 0.0
        %209 = vmatpush.msra.mxu0 0.0
        %210 = vmatpush.msra.mxu0 0.0
        %211 = vmatpush.msra.mxu0 0.0
        %212 = vmatpush.msra.mxu0 0.0
        %213 = vmatpush.msra.mxu0 0.0
        %214 = vmatpush.msra.mxu0 0.0
        %215 = vmatpush.msra.mxu0 0.0
        %216 = vmatpush.msra.mxu0 0.0
        %217 = vmatpush.msra.mxu0 0.0
        %218 = vmatpush.msra.mxu0 0.0
        %219 = vmatpush.msra.mxu0 0.0
        %220 = vmatpush.msra.mxu0 0.0
        %221 = vmatpush.msra.mxu0 %v197
        %222 = vmatpush.msra.mxu0 %v196
        %223 = vmatpush.msra.mxu0 %v195
        %224 = vmatmul.f32.gmra.mxu0 %v206
        %v225 = vpop.f32.mrf.mxu0
        %v226 = vadd.f32 %v202, %v225
        %227 = vdwg.mxu0
        %vm228 = vcmask 64512
        %229 = vst.msk [vmem:[%s185] sm:$0xff] %vm228, %v226
        %s230 = sand.u32 %s109, 1
        %s231 = scalar_lea.sflag [#allocation3], %s230
        %s232 = sand.u32 %s109, 1
        %s233 = smul.addr %s232, 8
        %s234 = scalar_lea.vmem [#allocation2], %s233
        // Predicated region
        $region33: #{tpu_custom_call.1} parent=31 // pred_check
          %p235 = pneg %p119
        $region34: #{tpu_custom_call.1} parent=31 // pred_check_branch
          %237 = sbr.rel (%p235) target = $region36
        $region35: #{tpu_custom_call.1} parent=31 // pred_region
          %239 = vsyncadd %s231, 0
          %s240 = sadd.s32 %s22, %s21
          %s241 = smul.addr %s240, 8
          %s242 = scalar_lea.hbm %s3, %s241
          %s244 = sshll.u32 %s234, 4
          %s245 = int_to_ptr.vmem [resolvable:$true] %s244
          %s246 = sshll.u32 %s242, 4
          %s247 = int_to_ptr.hbm [resolvable:$true] %s246
          %249 = dma.vmem_to_hbm [thread:$0]  %s245, 128, %s247, %s231
        $region36: #{tpu_custom_call.1} parent=31 // pred_fallthru
          _
      $region32: #{tpu_custom_call.1} parent=5 // pred_fallthru
        _
      %p250 = scmp.le.s32.totalorder 2, %s12
      // Predicated region
      $region37: #{tpu_custom_call.1} parent=5 // pred_check
        %p251 = pneg %p250
      $region38: #{tpu_custom_call.1} parent=5 // pred_check_branch
        %253 = sbr.rel (%p251) target = $region40
      $region39: #{tpu_custom_call.1} parent=5 // pred_region
        %s254 = ssub.s32 %s12, 2
        // Predicated region
        $region41: #{tpu_custom_call.1} parent=39 // pred_check
          %p255 = pneg %p125
        $region42: #{tpu_custom_call.1} parent=39 // pred_check_branch
          %257 = sbr.rel (%p255) target = $region44
        $region43: #{tpu_custom_call.1} parent=39 // pred_region
          %s258 = sand.u32 %s110, 1
          %s259 = scalar_lea.sflag [#allocation3], %s258
          %s260 = sand.u32 %s110, 1
          %s261 = smul.addr %s260, 8
          %s262 = scalar_lea.vmem [#allocation2], %s261
          %264 = dma.done %s259, 128
        $region44: #{tpu_custom_call.1} parent=39 // pred_fallthru
          _
      $region40: #{tpu_custom_call.1} parent=5 // pred_fallthru
        _
    $region6: #{tpu_custom_call.1} parent=1 // loop_footer
      %s16 = sadd.s32 1, %s12
    $region7: #{tpu_custom_call.1} parent=1 // loop_footer_branch
      %11 = sbr.rel target = $region3
    $region8: #{tpu_custom_call.1} parent=1 // loop_exit
      _
    %265 = vsyncpa [#allocation3], 1
    %s266 = scalar_lea.sflag [#allocation3], 1
    %267 = vsyncpa %s266, 1

</llo_original>
